<compile_context>
chip_gen: v7x
topology: tpu7x:2x2x1
jax: 0.10.0
libtpu: 0.0.40
codegen_flags: <defaults>
</compile_context>

<pallas_src>
import numpy as np
import jax
import jax.numpy as jnp
from jax.experimental import pallas as pl
from jax.experimental.pallas import tpu as pltpu


def _compute_full_perm(input_shape, ignore_dims, perm):
    # Mirrors PermuteAxes.__init__ (elementwise-shift semantics, ignore_dims=1):
    # perm=[1,2,0], ignore_dims=1  ->  full_perm=(0,2,3,1)  (NCHW -> NHWC).
    perm = np.asarray(perm, dtype=int) + np.full(len(perm), ignore_dims, dtype=int)
    new_perm = np.arange(len(perm) + ignore_dims, dtype=int)
    new_perm[1:] = perm
    return tuple(int(p) for p in new_perm)


def _transpose_tile_kernel(x_ref, o_ref):
    # x_ref: (C_TILE, HW_TILE) -> o_ref: (HW_TILE, C_TILE).
    # Lane-layout-aware minor-dim swap on the XLU; with no other compute it
    # stays fully hidden under the HBM DMAs.
    if hasattr(pltpu, "einshape"):
        o_ref[...] = pltpu.einshape("ch->hc", x_ref[...])
    else:
        o_ref[...] = jnp.transpose(x_ref[...], (1, 0))


def _vmem_capacity_bytes():
    """Per-TensorCore VMEM capacity; conservative 64 MiB (v7x) fallback."""
    try:
        info = pltpu.get_tpu_info()
        cap = getattr(info, "vmem_capacity_bytes", None)
        if cap:
            return int(cap)
    except Exception:
        pass
    return 64 * 1024 * 1024


def _largest_aligned_divisor(dim, max_elems):
    """Largest multiple of 128 dividing `dim` that is <= max_elems, else None."""
    if dim % 128 != 0:
        return None
    best = None
    upper = min(dim, max_elems)
    for t in range(128, upper + 1, 128):
        if dim % t == 0:
            best = t
    return best


def permute_axes(x, input_shape, ignore_dims=1, perm=None):
    full_perm = _compute_full_perm(input_shape, ignore_dims, perm)

    if x.ndim != 4 or full_perm != (0, 2, 3, 1):
        # TODO(synk): only the NCHW->NHWC instantiation is implemented as a
        # Pallas kernel; other permutations go through XLA's transpose.
        return jnp.transpose(x, full_perm)

    B, C, H, W = x.shape
    hw = H * W
    itemsize = jnp.dtype(x.dtype).itemsize
    total_bytes = B * C * hw * itemsize

    if C < 128 or total_bytes < (1 << 20):
        # Fast path.  For C < 128 the Pallas output block's last dim would be
        # C: masked stores at C/128 lane efficiency and a lane-padded VMEM out
        # buffer -- XLA's transpose is strictly better in that regime.  Tiny
        # inputs likewise never amortize the pallas_call fixed per-step cost.
        # TODO(synk): a lane-dense repack (flat (B, hw*C) output with an
        # in-register channel interleave) could reclaim the C < 128 case, but
        # the sub-128-lane reshape is not reliably lowered by Mosaic.
        return jnp.transpose(x, full_perm)

    # --- generation-aware tile budget --------------------------------------
    # Pure HBM-bandwidth op: the only non-DMA cost is the ~0.35 us/grid-step
    # overhead, so pick the biggest tiles the per-core VMEM allows.
    #   v7x : 64 MiB/TC -> vmem_limit ~48 MiB, ~8 MiB per buffer
    #   v6e : 128 MiB   -> vmem_limit ~96 MiB, ~16 MiB per buffer
    #   v5e : 128 MiB   -> vmem_limit ~96 MiB, ~16 MiB per buffer
    # With in+out double-buffered there are 4 live tiles; /6 leaves headroom
    # for Mosaic internal scratch (and for a Buffered(3) sweep).
    vmem_cap = _vmem_capacity_bytes()
    vmem_limit = min((vmem_cap * 3) // 4, 100 * 1024 * 1024)
    per_buffer_elems = max((vmem_limit // 6) // itemsize, 128 * 128)

    # --- tile selection -----------------------------------------------------
    # Prefer c_tile == C: the output block's last dim is then the full channel
    # dim, so each output block is one contiguous, fully lane-dense HBM write.
    # Only tile C when forced by the VMEM budget.
    c_tile = hw_tile = None
    if C <= per_buffer_elems:
        hw_budget = per_buffer_elems // C
        if hw <= hw_budget:
            c_tile, hw_tile = C, hw
        else:
            t = _largest_aligned_divisor(hw, hw_budget)
            if t is not None:
                c_tile, hw_tile = C, t
    if c_tile is None:
        # Huge C*hw: both tiles must be 128-aligned divisors so the in/out
        # blocks satisfy the (8,128) rule with lane-dense stores.
        ct = _largest_aligned_divisor(C, per_buffer_elems // 128)
        if ct is not None:
            ht = _largest_aligned_divisor(hw, per_buffer_elems // ct)
            if ht is not None:
                c_tile, hw_tile = ct, ht
    if c_tile is None:
        # TODO(synk): non-128-aligned shapes that don't fit a full-dim block
        # would need a pl.cdiv grid with masked tails; delegate to XLA rather
        # than risk a VMEM blowup from a full-dim fallback block.
        return jnp.transpose(x, full_perm)

    assert C % c_tile == 0 and hw % hw_tile == 0
    grid = (B, C // c_tile, hw // hw_tile)

    x2 = x.reshape(B, C, hw)  # free view for contiguous NCHW input

    out2 = pl.pallas_call(
        _transpose_tile_kernel,
        out_shape=jax.ShapeDtypeStruct((B, hw, C), x.dtype),
        grid_spec=pltpu.PrefetchScalarGridSpec(
            num_scalar_prefetch=0,
            grid=grid,
            # Default Buffered(2) pipelining: with essentially zero compute the
            # read/write DMAs already overlap; sweep pl.Buffered(3) on the
            # input spec on hardware if the profiler shows exposed writeback.
            in_specs=[
                pl.BlockSpec(
                    (pl.Squeezed(), c_tile, hw_tile),
                    lambda b, c, h: (b, c, h),
                )
            ],
            out_specs=pl.BlockSpec(
                (pl.Squeezed(), hw_tile, c_tile),
                lambda b, c, h: (b, h, c),
            ),
        ),
        compiler_params=pltpu.CompilerParams(
            # All axes data-parallel; on v7x (2 TCs) the megacore split lands
            # on whichever parallel axis has blocks (c_tiles is usually 1, so
            # the hw-tile axis carries the work even when B == 1).  The VMEM
            # budget above is per TC, matching v7x's 64 MiB/TC limit.
            dimension_semantics=("parallel", "parallel", "parallel"),
            vmem_limit_bytes=vmem_limit,
        ),
        cost_estimate=pl.CostEstimate(
            flops=0,
            transcendentals=0,
            bytes_accessed=2 * total_bytes,
        ),
    )(x2)

    return out2.reshape(B, H, W, C)  # free glue reshape


if __name__ == "__main__":
    # 1) The module's own small configuration (B=2, C=4, 16x16).  C < 128 and
    #    the whole tensor is 8 KiB, so the wrapper takes the XLA fast path.
    B, C, H, W = 2, 4, 16, 16
    x_small = jax.random.normal(jax.random.PRNGKey(0), (B, C, H, W), dtype=jnp.float32)
    out_small = permute_axes(x_small, [C, H, W], ignore_dims=1, perm=[1, 2, 0])
    out_small = jax.block_until_ready(out_small)
    assert out_small.shape == (B, H, W, C)
    assert jnp.array_equal(out_small, jnp.transpose(x_small, (0, 2, 3, 1)))

    # 2) A lane-aligned configuration (2 MiB, C=128) that exercises the Pallas
    #    tile-transpose kernel end-to-end.
    B2, C2, H2, W2 = 2, 128, 64, 32
    x_big = jax.random.normal(jax.random.PRNGKey(0), (B2, C2, H2, W2), dtype=jnp.float32)
    out_big = permute_axes(x_big, [C2, H2, W2], ignore_dims=1, perm=[1, 2, 0])
    out_big = jax.block_until_ready(out_big)
    assert out_big.shape == (B2, H2, W2, C2)
    assert jnp.array_equal(out_big, jnp.transpose(x_big, (0, 2, 3, 1)))

    print("KERNEL_OK")
</pallas_src>

<mosaic_0001>
module attributes {stable_mosaic.version = 11 : i64} {
  func.func @_transpose_tile_kernel(%arg0: i32, %arg1: i32, %arg2: i32, %arg3: memref<1x128x2048xf32, #tpu.memory_space<vmem>>, %arg4: memref<1x2048x128xf32, #tpu.memory_space<vmem>>) attributes {dimension_semantics = [#tpu.dimension_semantics<parallel>, #tpu.dimension_semantics<parallel>, #tpu.dimension_semantics<parallel>], iteration_bounds = array<i64: 2, 1, 1>, scalar_prefetch = 0 : i64, scratch_operands = 0 : i64, tpu.core_type = #tpu.core_type<tc>, window_params = [{transform_indices = @transform_0, window_bounds = array<i64: 1, 128, 2048>}, {transform_indices = @transform_1, window_bounds = array<i64: 1, 2048, 128>}]} {
    %c0 = arith.constant 0 : index
    %c0_0 = arith.constant 0 : index
    %c0_1 = arith.constant 0 : index
    %0 = vector.load %arg3[%c0, %c0_0, %c0_1] : memref<1x128x2048xf32, #tpu.memory_space<vmem>>, vector<1x128x2048xf32>
    %1 = vector.shape_cast %0 : vector<1x128x2048xf32> to vector<128x2048xf32>
    %2 = tpu.transpose %1, [1, 0] : vector<128x2048xf32> -> vector<2048x128xf32>
    %c0_2 = arith.constant 0 : index
    %c0_3 = arith.constant 0 : index
    %c0_4 = arith.constant 0 : index
    %3 = vector.load %arg4[%c0_2, %c0_3, %c0_4] : memref<1x2048x128xf32, #tpu.memory_space<vmem>>, vector<1x2048x128xf32>
    %4 = vector.shape_cast %3 : vector<1x2048x128xf32> to vector<2048x128xf32>
    %5 = vector.shape_cast %2 : vector<2048x128xf32> to vector<1x2048x128xf32>
    tpu.vector_store %arg4[%c0_2, %c0_3, %c0_4], %5 {strides = array<i32>} : memref<1x2048x128xf32, #tpu.memory_space<vmem>>, vector<1x2048x128xf32>,
    return
  }
  func.func @transform_0(%arg0: i32, %arg1: i32, %arg2: i32) -> (i32, i32, i32) {
    %c0_i32 = arith.constant 0 : i32
    return %arg0, %arg1, %arg2 : i32, i32, i32
  }
  func.func @transform_1(%arg0: i32, %arg1: i32, %arg2: i32) -> (i32, i32, i32) {
    %c0_i32 = arith.constant 0 : i32
    return %arg0, %arg2, %arg1 : i32, i32, i32
  }
}

</mosaic_0001>

<llo_original>
// kernel: tpu_custom_call.1
$region0: #{tpu_custom_call.1}
  #allocation0 [shape = 'u32[]', space=smem, size = 0x4, offset = 0x4, fixed_abs, tag = 'smem constant byte address 0x4 - core index']
  #allocation1 [shape = 'u32[144,128]{1,0:T(1,128)}', space=vmem, size = 0x12000, scoped, tag = 'internal scratch']
  %s0 = inlined_call_operand.hbm [shape: f32[2,128,2048], index: 0, kind: input, shape index: {}]
  %s1 = inlined_call_operand.hbm [shape: f32[2,2048,128], index: 1, kind: output, shape index: {}]
  %s2 = sld [smem:[#allocation0]]
  $region41: #{tpu_custom_call.1} parent=0
    _
  %s4 = ssub.s32 1, %s2
  %s5 = scalar_select 0, %s4, %s2
  $region1: #{tpu_custom_call.1} parent=0
    #allocation2 [shape = 'u8[2097152]{0}', space=vmem, size = 0x200000, scoped, tag = 'input window, operand 0']
    #allocation3 [shape = 's32[2]{0}', space=sflag, size = 0x8, scoped, tag = 'scoped memory for tpu_custom_call.1']
    #allocation4 [shape = 's32[2]{0}', space=sflag, size = 0x8, scoped, tag = 'scoped memory for tpu_custom_call.1']
    #allocation5 [shape = 'u8[2097152]{0}', space=vmem, size = 0x200000, scoped, tag = 'output window, operand 0']
    %6 = vsyncpa [#allocation3], 0
    %s7 = scalar_lea.sflag [#allocation3], 1
    %8 = vsyncpa %s7, 0
    %9 = vsyncpa [#allocation4], 0
    %s10 = scalar_lea.sflag [#allocation4], 1
    %11 = vsyncpa %s10, 0
    loop: start=0, step=1, limit=4
    $region2: #{tpu_custom_call.1} parent=1 // loop_pre_header
      _
    $region3: #{tpu_custom_call.1} parent=1 // loop_header
      %s13 = sphi 0, %s17
      %p14 = scmp.ge.s32.totalorder %s13, 4
      %s20 = sphi 0, %s39
      %s21 = sphi 0, %s35
      %s22 = sphi 0, %s31
      %s23 = sphi 0, %s20
      %s24 = sphi 0, %s21
      %s25 = sphi 0, %s22
      %s26 = sphi 0, %s23
      %s27 = sphi 0, %s24
      %s28 = sphi 0, %s25
      %s46 = sphi 0, %s48
      %s49 = sphi 0, %s46
      %s50 = sphi 0, %s49
      %s66 = sphi 0, %s50
      %s76 = sphi 0, %s78
      %s79 = sphi 0, %s76
      %s80 = sphi 0, %s79
      %s96 = sphi 0, %s80
    $region4: #{tpu_custom_call.1} parent=1 // loop_header_branch
      %16 = sbr.rel (%p14) target = $region8
    $region5: #{tpu_custom_call.1} parent=1 // loop_body
      %s18 = ssub.s32 %s13, 1
      %s19 = ssub.s32 %s13, 2
      %s29 = sadd.s32 1, %s22
      %p30 = scmp.ge.s32.totalorder %s29, 1
      %s31 = scalar_select %p30, 0, %s29
      %s32 = sadd.s32 1, %s21
      %s33 = scalar_select %p30, %s32, %s21
      %p34 = scmp.ge.s32.totalorder %s33, 1
      %s35 = scalar_select %p34, 0, %s33
      %s36 = sadd.s32 1, %s20
      %s37 = scalar_select %p34, %s36, %s20
      %p38 = scmp.ge.s32.totalorder %s37, 2
      %s39 = scalar_select %p38, 0, %s37
      %s40 = ssub.s32 %s20, %s39
      %s41 = ssub.s32 %s21, %s35
      %s42 = sor.u32 %s40, %s41
      %s43 = ssub.s32 %s22, %s31
      %s44 = sor.u32 %s42, %s43
      %p45 = scmp.eq.s32.totalorder %s44, 0
      %s47 = sadd.s32 %s46, 1
      %s48 = scalar_select %p45, %s46, %s47
      %p51 = pneg %p45
      %p52 = scmp.eq.s32.totalorder %s13, 1
      %p53 = por %p51, %p52
      %p54 = scmp.ne.s32.totalorder %s46, %s49
      %p55 = scmp.eq.s32.totalorder %s13, 0
      %p56 = por %p54, %p55
      %p57 = scmp.ne.s32.totalorder %s46, %s49
      %p58 = scmp.eq.s32.totalorder %s18, 1
      %p59 = por %p57, %p58
      %p60 = scmp.ne.s32.totalorder %s49, %s50
      %p61 = scmp.eq.s32.totalorder %s18, 0
      %p62 = por %p60, %p61
      %p63 = scmp.ne.s32.totalorder %s49, %s50
      %p64 = scmp.eq.s32.totalorder %s19, 1
      %p65 = por %p63, %p64
      %p67 = scmp.ne.s32.totalorder %s50, %s66
      %p68 = scmp.eq.s32.totalorder %s19, 0
      %p69 = por %p67, %p68
      %s70 = ssub.s32 %s20, %s39
      %s71 = ssub.s32 %s22, %s31
      %s72 = sor.u32 %s70, %s71
      %s73 = ssub.s32 %s21, %s35
      %s74 = sor.u32 %s72, %s73
      %p75 = scmp.eq.s32.totalorder %s74, 0
      %s77 = sadd.s32 %s76, 1
      %s78 = scalar_select %p75, %s76, %s77
      %p81 = pneg %p75
      %p82 = scmp.eq.s32.totalorder %s13, 1
      %p83 = por %p81, %p82
      %p84 = scmp.ne.s32.totalorder %s76, %s79
      %p85 = scmp.eq.s32.totalorder %s13, 0
      %p86 = por %p84, %p85
      %p87 = scmp.ne.s32.totalorder %s76, %s79
      %p88 = scmp.eq.s32.totalorder %s18, 1
      %p89 = por %p87, %p88
      %p90 = scmp.ne.s32.totalorder %s79, %s80
      %p91 = scmp.eq.s32.totalorder %s18, 0
      %p92 = por %p90, %p91
      %p93 = scmp.ne.s32.totalorder %s79, %s80
      %p94 = scmp.eq.s32.totalorder %s19, 1
      %p95 = por %p93, %p94
      %p97 = scmp.ne.s32.totalorder %s80, %s96
      %p98 = scmp.eq.s32.totalorder %s19, 0
      %p99 = por %p97, %p98
      %p100 = scmp.le.s32.totalorder 1, %s13
      %p101 = scmp.lt.s32.totalorder %s13, 3
      %p102 = pnand %p100, %p101
      %p103 = pneg %p102
      // Predicated region
      $region9: #{tpu_custom_call.1} parent=5 // pred_check
        _
      $region10: #{tpu_custom_call.1} parent=5 // pred_check_branch
        %105 = sbr.rel (%p102) target = $region12
      $region11: #{tpu_custom_call.1} parent=5 // pred_region
        %s106 = ssub.s32 %s13, 1
      $region12: #{tpu_custom_call.1} parent=5 // pred_fallthru
        _
      %p107 = scmp.lt.s32.totalorder %s13, 2
      // Predicated region
      $region13: #{tpu_custom_call.1} parent=5 // pred_check
        %p108 = pneg %p107
      $region14: #{tpu_custom_call.1} parent=5 // pred_check_branch
        %110 = sbr.rel (%p108) target = $region16
      $region15: #{tpu_custom_call.1} parent=5 // pred_region
        // Predicated region
        $region17: #{tpu_custom_call.1} parent=15 // pred_check
          %p111 = pneg %p56
        $region18: #{tpu_custom_call.1} parent=15 // pred_check_branch
          %113 = sbr.rel (%p111) target = $region20
        $region19: #{tpu_custom_call.1} parent=15 // pred_region
          %s114 = sand.u32 %s46, 1
          %s115 = scalar_lea.sflag [#allocation3], %s114
          %s116 = sand.u32 %s46, 1
          %s117 = smul.addr %s116, 2048
          %s118 = scalar_lea.vmem [#allocation2], %s117
          %s119 = smul.u32 16, %s21
          %s120 = smul.u32 16, %s22
          %s122 = ssub.s32 32768, 32768
          %123 = vsyncadd %s115, %s122
          %s124 = smul.addr %s119, 16
          %s125 = sadd.s32 %s120, %s124
          %s126 = smul.addr %s20, 256
          %s127 = sadd.s32 %s125, %s126
          %s128 = smul.addr %s127, 128
          %s129 = scalar_lea.hbm %s0, %s128
          %s130 = sshll.u32 %s118, 4
          %s131 = int_to_ptr.vmem [resolvable:$true] %s130
          %136 = dma.hbm_to_vmem [thread:$0]  %s129, 32768, %s131, %s115, 2048, 2048, 128
        $region20: #{tpu_custom_call.1} parent=15 // pred_fallthru
          _
      $region16: #{tpu_custom_call.1} parent=5 // pred_fallthru
        _
      %p137 = scmp.le.s32.totalorder 1, %s13
      %p138 = scmp.lt.s32.totalorder %s13, 3
      %p139 = pnand %p137, %p138
      %p140 = pneg %p139
      // Predicated region
      $region21: #{tpu_custom_call.1} parent=5 // pred_check
        _
      $region22: #{tpu_custom_call.1} parent=5 // pred_check_branch
        %142 = sbr.rel (%p139) target = $region24
      $region23: #{tpu_custom_call.1} parent=5 // pred_region
        %s143 = ssub.s32 %s13, 1
        %s144 = sand.u32 %s49, 1
        %s145 = scalar_lea.sflag [#allocation3], %s144
        %s146 = sand.u32 %s49, 1
        %s147 = smul.addr %s146, 2048
        %s148 = scalar_lea.vmem [#allocation2], %s147
        // Predicated region
        $region25: #{tpu_custom_call.1} parent=23 // pred_check
          %p149 = pneg %p62
        $region26: #{tpu_custom_call.1} parent=23 // pred_check_branch
          %151 = sbr.rel (%p149) target = $region28
        $region27: #{tpu_custom_call.1} parent=23 // pred_region
          %152 = dma.done %s145, 32768
        $region28: #{tpu_custom_call.1} parent=23 // pred_fallthru
          _
        %s153 = sand.u32 %s49, 1
        %s154 = scalar_lea.sflag [#allocation3], %s153
        %s155 = sand.u32 %s49, 1
        %s156 = smul.addr %s155, 2048
        %s157 = scalar_lea.vmem [#allocation2], %s156
        %p158 = pneg %p62
        %p159 = pneg %p59
        %p160 = pneg %p92
        %p161 = pneg %p89
        %s162 = sand.u32 %s79, 1
        %s163 = scalar_lea.sflag [#allocation4], %s162
        %s164 = sand.u32 %s79, 1
        %s165 = smul.addr %s164, 2048
        %s166 = scalar_lea.vmem [#allocation5], %s165
        %s167 = smul.u32 16, %s24
        %s168 = smul.u32 16, %s25
        %s169 = smul.u32 256, %s25
        %v170 = vld [vmem:[%s148] sm:$0xff]
        %v171 = vld [vmem:[%s148 + $0x8] sm:$0xff]
        %v172 = vld [vmem:[%s148 + $0x10] sm:$0xff]
        %v173 = vld [vmem:[%s148 + $0x18] sm:$0xff]
        %v174 = vld [vmem:[%s148 + $0x20] sm:$0xff]
        %v175 = vld [vmem:[%s148 + $0x28] sm:$0xff]
        %v176 = vld [vmem:[%s148 + $0x30] sm:$0xff]
        %v177 = vld [vmem:[%s148 + $0x38] sm:$0xff]
        %v178 = vld [vmem:[%s148 + $0x40] sm:$0xff]
        %v179 = vld [vmem:[%s148 + $0x48] sm:$0xff]
        %v180 = vld [vmem:[%s148 + $0x50] sm:$0xff]
        %v181 = vld [vmem:[%s148 + $0x58] sm:$0xff]
        %v182 = vld [vmem:[%s148 + $0x60] sm:$0xff]
        %v183 = vld [vmem:[%s148 + $0x68] sm:$0xff]
        %v184 = vld [vmem:[%s148 + $0x70] sm:$0xff]
        %v185 = vld [vmem:[%s148 + $0x78] sm:$0xff]
        %v186 = vld [vmem:[%s148 + $0x80] sm:$0xff]
        %v187 = vld [vmem:[%s148 + $0x88] sm:$0xff]
        %v188 = vld [vmem:[%s148 + $0x90] sm:$0xff]
        %v189 = vld [vmem:[%s148 + $0x98] sm:$0xff]
        %v190 = vld [vmem:[%s148 + $0xa0] sm:$0xff]
        %v191 = vld [vmem:[%s148 + $0xa8] sm:$0xff]
        %v192 = vld [vmem:[%s148 + $0xb0] sm:$0xff]
        %v193 = vld [vmem:[%s148 + $0xb8] sm:$0xff]
        %v194 = vld [vmem:[%s148 + $0xc0] sm:$0xff]
        %v195 = vld [vmem:[%s148 + $0xc8] sm:$0xff]
        %v196 = vld [vmem:[%s148 + $0xd0] sm:$0xff]
        %v197 = vld [vmem:[%s148 + $0xd8] sm:$0xff]
        %v198 = vld [vmem:[%s148 + $0xe0] sm:$0xff]
        %v199 = vld [vmem:[%s148 + $0xe8] sm:$0xff]
        %v200 = vld [vmem:[%s148 + $0xf0] sm:$0xff]
        %v201 = vld [vmem:[%s148 + $0xf8] sm:$0xff]
        %v202 = vld [vmem:[%s148 + $0x100] sm:$0xff]
        %v203 = vld [vmem:[%s148 + $0x108] sm:$0xff]
        %v204 = vld [vmem:[%s148 + $0x110] sm:$0xff]
        %v205 = vld [vmem:[%s148 + $0x118] sm:$0xff]
        %v206 = vld [vmem:[%s148 + $0x120] sm:$0xff]
        %v207 = vld [vmem:[%s148 + $0x128] sm:$0xff]
        %v208 = vld [vmem:[%s148 + $0x130] sm:$0xff]
        %v209 = vld [vmem:[%s148 + $0x138] sm:$0xff]
        %v210 = vld [vmem:[%s148 + $0x140] sm:$0xff]
        %v211 = vld [vmem:[%s148 + $0x148] sm:$0xff]
        %v212 = vld [vmem:[%s148 + $0x150] sm:$0xff]
        %v213 = vld [vmem:[%s148 + $0x158] sm:$0xff]
        %v214 = vld [vmem:[%s148 + $0x160] sm:$0xff]
        %v215 = vld [vmem:[%s148 + $0x168] sm:$0xff]
        %v216 = vld [vmem:[%s148 + $0x170] sm:$0xff]
        %v217 = vld [vmem:[%s148 + $0x178] sm:$0xff]
        %v218 = vld [vmem:[%s148 + $0x180] sm:$0xff]
        %v219 = vld [vmem:[%s148 + $0x188] sm:$0xff]
        %v220 = vld [vmem:[%s148 + $0x190] sm:$0xff]
        %v221 = vld [vmem:[%s148 + $0x198] sm:$0xff]
        %v222 = vld [vmem:[%s148 + $0x1a0] sm:$0xff]
        %v223 = vld [vmem:[%s148 + $0x1a8] sm:$0xff]
        %v224 = vld [vmem:[%s148 + $0x1b0] sm:$0xff]
        %v225 = vld [vmem:[%s148 + $0x1b8] sm:$0xff]
        %v226 = vld [vmem:[%s148 + $0x1c0] sm:$0xff]
        %v227 = vld [vmem:[%s148 + $0x1c8] sm:$0xff]
        %v228 = vld [vmem:[%s148 + $0x1d0] sm:$0xff]
        %v229 = vld [vmem:[%s148 + $0x1d8] sm:$0xff]
        %v230 = vld [vmem:[%s148 + $0x1e0] sm:$0xff]
        %v231 = vld [vmem:[%s148 + $0x1e8] sm:$0xff]
        %v232 = vld [vmem:[%s148 + $0x1f0] sm:$0xff]
        %v233 = vld [vmem:[%s148 + $0x1f8] sm:$0xff]
        %v234 = vld [vmem:[%s148 + $0x200] sm:$0xff]
        %v235 = vld [vmem:[%s148 + $0x208] sm:$0xff]
        %v236 = vld [vmem:[%s148 + $0x210] sm:$0xff]
        %v237 = vld [vmem:[%s148 + $0x218] sm:$0xff]
        %v238 = vld [vmem:[%s148 + $0x220] sm:$0xff]
        %v239 = vld [vmem:[%s148 + $0x228] sm:$0xff]
        %v240 = vld [vmem:[%s148 + $0x230] sm:$0xff]
        %v241 = vld [vmem:[%s148 + $0x238] sm:$0xff]
        %v242 = vld [vmem:[%s148 + $0x240] sm:$0xff]
        %v243 = vld [vmem:[%s148 + $0x248] sm:$0xff]
        %v244 = vld [vmem:[%s148 + $0x250] sm:$0xff]
        %v245 = vld [vmem:[%s148 + $0x258] sm:$0xff]
        %v246 = vld [vmem:[%s148 + $0x260] sm:$0xff]
        %v247 = vld [vmem:[%s148 + $0x268] sm:$0xff]
        %v248 = vld [vmem:[%s148 + $0x270] sm:$0xff]
        %v249 = vld [vmem:[%s148 + $0x278] sm:$0xff]
        %v250 = vld [vmem:[%s148 + $0x280] sm:$0xff]
        %v251 = vld [vmem:[%s148 + $0x288] sm:$0xff]
        %v252 = vld [vmem:[%s148 + $0x290] sm:$0xff]
        %v253 = vld [vmem:[%s148 + $0x298] sm:$0xff]
        %v254 = vld [vmem:[%s148 + $0x2a0] sm:$0xff]
        %v255 = vld [vmem:[%s148 + $0x2a8] sm:$0xff]
        %v256 = vld [vmem:[%s148 + $0x2b0] sm:$0xff]
        %v257 = vld [vmem:[%s148 + $0x2b8] sm:$0xff]
        %v258 = vld [vmem:[%s148 + $0x2c0] sm:$0xff]
        %v259 = vld [vmem:[%s148 + $0x2c8] sm:$0xff]
        %v260 = vld [vmem:[%s148 + $0x2d0] sm:$0xff]
        %v261 = vld [vmem:[%s148 + $0x2d8] sm:$0xff]
        %v262 = vld [vmem:[%s148 + $0x2e0] sm:$0xff]
        %v263 = vld [vmem:[%s148 + $0x2e8] sm:$0xff]
        %v264 = vld [vmem:[%s148 + $0x2f0] sm:$0xff]
        %v265 = vld [vmem:[%s148 + $0x2f8] sm:$0xff]
        %v266 = vld [vmem:[%s148 + $0x300] sm:$0xff]
        %v267 = vld [vmem:[%s148 + $0x308] sm:$0xff]
        %v268 = vld [vmem:[%s148 + $0x310] sm:$0xff]
        %v269 = vld [vmem:[%s148 + $0x318] sm:$0xff]
        %v270 = vld [vmem:[%s148 + $0x320] sm:$0xff]
        %v271 = vld [vmem:[%s148 + $0x328] sm:$0xff]
        %v272 = vld [vmem:[%s148 + $0x330] sm:$0xff]
        %v273 = vld [vmem:[%s148 + $0x338] sm:$0xff]
        %v274 = vld [vmem:[%s148 + $0x340] sm:$0xff]
        %v275 = vld [vmem:[%s148 + $0x348] sm:$0xff]
        %v276 = vld [vmem:[%s148 + $0x350] sm:$0xff]
        %v277 = vld [vmem:[%s148 + $0x358] sm:$0xff]
        %v278 = vld [vmem:[%s148 + $0x360] sm:$0xff]
        %v279 = vld [vmem:[%s148 + $0x368] sm:$0xff]
        %v280 = vld [vmem:[%s148 + $0x370] sm:$0xff]
        %v281 = vld [vmem:[%s148 + $0x378] sm:$0xff]
        %v282 = vld [vmem:[%s148 + $0x380] sm:$0xff]
        %v283 = vld [vmem:[%s148 + $0x388] sm:$0xff]
        %v284 = vld [vmem:[%s148 + $0x390] sm:$0xff]
        %v285 = vld [vmem:[%s148 + $0x398] sm:$0xff]
        %v286 = vld [vmem:[%s148 + $0x3a0] sm:$0xff]
        %v287 = vld [vmem:[%s148 + $0x3a8] sm:$0xff]
        %v288 = vld [vmem:[%s148 + $0x3b0] sm:$0xff]
        %v289 = vld [vmem:[%s148 + $0x3b8] sm:$0xff]
        %v290 = vld [vmem:[%s148 + $0x3c0] sm:$0xff]
        %v291 = vld [vmem:[%s148 + $0x3c8] sm:$0xff]
        %v292 = vld [vmem:[%s148 + $0x3d0] sm:$0xff]
        %v293 = vld [vmem:[%s148 + $0x3d8] sm:$0xff]
        %v294 = vld [vmem:[%s148 + $0x3e0] sm:$0xff]
        %v295 = vld [vmem:[%s148 + $0x3e8] sm:$0xff]
        %v296 = vld [vmem:[%s148 + $0x3f0] sm:$0xff]
        %v297 = vld [vmem:[%s148 + $0x3f8] sm:$0xff]
        %v298 = vld [vmem:[%s148 + $0x400] sm:$0xff]
        %v299 = vld [vmem:[%s148 + $0x408] sm:$0xff]
        %v300 = vld [vmem:[%s148 + $0x410] sm:$0xff]
        %v301 = vld [vmem:[%s148 + $0x418] sm:$0xff]
        %v302 = vld [vmem:[%s148 + $0x420] sm:$0xff]
        %v303 = vld [vmem:[%s148 + $0x428] sm:$0xff]
        %v304 = vld [vmem:[%s148 + $0x430] sm:$0xff]
        %v305 = vld [vmem:[%s148 + $0x438] sm:$0xff]
        %v306 = vld [vmem:[%s148 + $0x440] sm:$0xff]
        %v307 = vld [vmem:[%s148 + $0x448] sm:$0xff]
        %v308 = vld [vmem:[%s148 + $0x450] sm:$0xff]
        %v309 = vld [vmem:[%s148 + $0x458] sm:$0xff]
        %v310 = vld [vmem:[%s148 + $0x460] sm:$0xff]
        %v311 = vld [vmem:[%s148 + $0x468] sm:$0xff]
        %v312 = vld [vmem:[%s148 + $0x470] sm:$0xff]
        %v313 = vld [vmem:[%s148 + $0x478] sm:$0xff]
        %v314 = vld [vmem:[%s148 + $0x480] sm:$0xff]
        %v315 = vld [vmem:[%s148 + $0x488] sm:$0xff]
        %v316 = vld [vmem:[%s148 + $0x490] sm:$0xff]
        %v317 = vld [vmem:[%s148 + $0x498] sm:$0xff]
        %v318 = vld [vmem:[%s148 + $0x4a0] sm:$0xff]
        %v319 = vld [vmem:[%s148 + $0x4a8] sm:$0xff]
        %v320 = vld [vmem:[%s148 + $0x4b0] sm:$0xff]
        %v321 = vld [vmem:[%s148 + $0x4b8] sm:$0xff]
        %v322 = vld [vmem:[%s148 + $0x4c0] sm:$0xff]
        %v323 = vld [vmem:[%s148 + $0x4c8] sm:$0xff]
        %v324 = vld [vmem:[%s148 + $0x4d0] sm:$0xff]
        %v325 = vld [vmem:[%s148 + $0x4d8] sm:$0xff]
        %v326 = vld [vmem:[%s148 + $0x4e0] sm:$0xff]
        %v327 = vld [vmem:[%s148 + $0x4e8] sm:$0xff]
        %v328 = vld [vmem:[%s148 + $0x4f0] sm:$0xff]
        %v329 = vld [vmem:[%s148 + $0x4f8] sm:$0xff]
        %v330 = vld [vmem:[%s148 + $0x500] sm:$0xff]
        %v331 = vld [vmem:[%s148 + $0x508] sm:$0xff]
        %v332 = vld [vmem:[%s148 + $0x510] sm:$0xff]
        %v333 = vld [vmem:[%s148 + $0x518] sm:$0xff]
        %v334 = vld [vmem:[%s148 + $0x520] sm:$0xff]
        %v335 = vld [vmem:[%s148 + $0x528] sm:$0xff]
        %v336 = vld [vmem:[%s148 + $0x530] sm:$0xff]
        %v337 = vld [vmem:[%s148 + $0x538] sm:$0xff]
        %v338 = vld [vmem:[%s148 + $0x540] sm:$0xff]
        %v339 = vld [vmem:[%s148 + $0x548] sm:$0xff]
        %v340 = vld [vmem:[%s148 + $0x550] sm:$0xff]
        %v341 = vld [vmem:[%s148 + $0x558] sm:$0xff]
        %v342 = vld [vmem:[%s148 + $0x560] sm:$0xff]
        %v343 = vld [vmem:[%s148 + $0x568] sm:$0xff]
        %v344 = vld [vmem:[%s148 + $0x570] sm:$0xff]
        %v345 = vld [vmem:[%s148 + $0x578] sm:$0xff]
        %v346 = vld [vmem:[%s148 + $0x580] sm:$0xff]
        %v347 = vld [vmem:[%s148 + $0x588] sm:$0xff]
        %v348 = vld [vmem:[%s148 + $0x590] sm:$0xff]
        %v349 = vld [vmem:[%s148 + $0x598] sm:$0xff]
        %v350 = vld [vmem:[%s148 + $0x5a0] sm:$0xff]
        %v351 = vld [vmem:[%s148 + $0x5a8] sm:$0xff]
        %v352 = vld [vmem:[%s148 + $0x5b0] sm:$0xff]
        %v353 = vld [vmem:[%s148 + $0x5b8] sm:$0xff]
        %v354 = vld [vmem:[%s148 + $0x5c0] sm:$0xff]
        %v355 = vld [vmem:[%s148 + $0x5c8] sm:$0xff]
        %v356 = vld [vmem:[%s148 + $0x5d0] sm:$0xff]
        %v357 = vld [vmem:[%s148 + $0x5d8] sm:$0xff]
        %v358 = vld [vmem:[%s148 + $0x5e0] sm:$0xff]
        %v359 = vld [vmem:[%s148 + $0x5e8] sm:$0xff]
        %v360 = vld [vmem:[%s148 + $0x5f0] sm:$0xff]
        %v361 = vld [vmem:[%s148 + $0x5f8] sm:$0xff]
        %v362 = vld [vmem:[%s148 + $0x600] sm:$0xff]
        %v363 = vld [vmem:[%s148 + $0x608] sm:$0xff]
        %v364 = vld [vmem:[%s148 + $0x610] sm:$0xff]
        %v365 = vld [vmem:[%s148 + $0x618] sm:$0xff]
        %v366 = vld [vmem:[%s148 + $0x620] sm:$0xff]
        %v367 = vld [vmem:[%s148 + $0x628] sm:$0xff]
        %v368 = vld [vmem:[%s148 + $0x630] sm:$0xff]
        %v369 = vld [vmem:[%s148 + $0x638] sm:$0xff]
        %v370 = vld [vmem:[%s148 + $0x640] sm:$0xff]
        %v371 = vld [vmem:[%s148 + $0x648] sm:$0xff]
        %v372 = vld [vmem:[%s148 + $0x650] sm:$0xff]
        %v373 = vld [vmem:[%s148 + $0x658] sm:$0xff]
        %v374 = vld [vmem:[%s148 + $0x660] sm:$0xff]
        %v375 = vld [vmem:[%s148 + $0x668] sm:$0xff]
        %v376 = vld [vmem:[%s148 + $0x670] sm:$0xff]
        %v377 = vld [vmem:[%s148 + $0x678] sm:$0xff]
        %v378 = vld [vmem:[%s148 + $0x680] sm:$0xff]
        %v379 = vld [vmem:[%s148 + $0x688] sm:$0xff]
        %v380 = vld [vmem:[%s148 + $0x690] sm:$0xff]
        %v381 = vld [vmem:[%s148 + $0x698] sm:$0xff]
        %v382 = vld [vmem:[%s148 + $0x6a0] sm:$0xff]
        %v383 = vld [vmem:[%s148 + $0x6a8] sm:$0xff]
        %v384 = vld [vmem:[%s148 + $0x6b0] sm:$0xff]
        %v385 = vld [vmem:[%s148 + $0x6b8] sm:$0xff]
        %v386 = vld [vmem:[%s148 + $0x6c0] sm:$0xff]
        %v387 = vld [vmem:[%s148 + $0x6c8] sm:$0xff]
        %v388 = vld [vmem:[%s148 + $0x6d0] sm:$0xff]
        %v389 = vld [vmem:[%s148 + $0x6d8] sm:$0xff]
        %v390 = vld [vmem:[%s148 + $0x6e0] sm:$0xff]
        %v391 = vld [vmem:[%s148 + $0x6e8] sm:$0xff]
        %v392 = vld [vmem:[%s148 + $0x6f0] sm:$0xff]
        %v393 = vld [vmem:[%s148 + $0x6f8] sm:$0xff]
        %v394 = vld [vmem:[%s148 + $0x700] sm:$0xff]
        %v395 = vld [vmem:[%s148 + $0x708] sm:$0xff]
        %v396 = vld [vmem:[%s148 + $0x710] sm:$0xff]
        %v397 = vld [vmem:[%s148 + $0x718] sm:$0xff]
        %v398 = vld [vmem:[%s148 + $0x720] sm:$0xff]
        %v399 = vld [vmem:[%s148 + $0x728] sm:$0xff]
        %v400 = vld [vmem:[%s148 + $0x730] sm:$0xff]
        %v401 = vld [vmem:[%s148 + $0x738] sm:$0xff]
        %v402 = vld [vmem:[%s148 + $0x740] sm:$0xff]
        %v403 = vld [vmem:[%s148 + $0x748] sm:$0xff]
        %v404 = vld [vmem:[%s148 + $0x750] sm:$0xff]
        %v405 = vld [vmem:[%s148 + $0x758] sm:$0xff]
        %v406 = vld [vmem:[%s148 + $0x760] sm:$0xff]
        %v407 = vld [vmem:[%s148 + $0x768] sm:$0xff]
        %v408 = vld [vmem:[%s148 + $0x770] sm:$0xff]
        %v409 = vld [vmem:[%s148 + $0x778] sm:$0xff]
        %v410 = vld [vmem:[%s148 + $0x780] sm:$0xff]
        %v411 = vld [vmem:[%s148 + $0x788] sm:$0xff]
        %v412 = vld [vmem:[%s148 + $0x790] sm:$0xff]
        %v413 = vld [vmem:[%s148 + $0x798] sm:$0xff]
        %v414 = vld [vmem:[%s148 + $0x7a0] sm:$0xff]
        %v415 = vld [vmem:[%s148 + $0x7a8] sm:$0xff]
        %v416 = vld [vmem:[%s148 + $0x7b0] sm:$0xff]
        %v417 = vld [vmem:[%s148 + $0x7b8] sm:$0xff]
        %v418 = vld [vmem:[%s148 + $0x7c0] sm:$0xff]
        %v419 = vld [vmem:[%s148 + $0x7c8] sm:$0xff]
        %v420 = vld [vmem:[%s148 + $0x7d0] sm:$0xff]
        %v421 = vld [vmem:[%s148 + $0x7d8] sm:$0xff]
        %v422 = vld [vmem:[%s148 + $0x7e0] sm:$0xff]
        %v423 = vld [vmem:[%s148 + $0x7e8] sm:$0xff]
        %v424 = vld [vmem:[%s148 + $0x7f0] sm:$0xff]
        %v425 = vld [vmem:[%s148 + $0x7f8] sm:$0xff]
        %426 = vxpose.xlu0.b32.start [1/16] %v170, 128
        %427 = vxpose.xlu0.b32.cont [2/16] %v186, 128
        %428 = vxpose.xlu0.b32.cont [3/16] %v202, 128
        %429 = vxpose.xlu0.b32.cont [4/16] %v218, 128
        %430 = vxpose.xlu0.b32.cont [5/16] %v234, 128
        %431 = vxpose.xlu0.b32.cont [6/16] %v250, 128
        %432 = vxpose.xlu0.b32.cont [7/16] %v266, 128
        %433 = vxpose.xlu0.b32.cont [8/16] %v282, 128
        %434 = vxpose.xlu0.b32.cont [9/16] %v298, 128
        %435 = vxpose.xlu0.b32.cont [10/16] %v314, 128
        %436 = vxpose.xlu0.b32.cont [11/16] %v330, 128
        %437 = vxpose.xlu0.b32.cont [12/16] %v346, 128
        %438 = vxpose.xlu0.b32.cont [13/16] %v362, 128
        %439 = vxpose.xlu0.b32.cont [14/16] %v378, 128
        %440 = vxpose.xlu0.b32.cont [15/16] %v394, 128
        %441 = vxpose.xlu0.b32.end [16/16] %v410, 128
        %v442 = vpop.trf.xlu0
        %v443 = vpop.trf.xlu0
        %v444 = vpop.trf.xlu0
        %v445 = vpop.trf.xlu0
        %v446 = vpop.trf.xlu0
        %v447 = vpop.trf.xlu0
        %v448 = vpop.trf.xlu0
        %v449 = vpop.trf.xlu0
        %v450 = vpop.trf.xlu0
        %v451 = vpop.trf.xlu0
        %v452 = vpop.trf.xlu0
        %v453 = vpop.trf.xlu0
        %v454 = vpop.trf.xlu0
        %v455 = vpop.trf.xlu0
        %v456 = vpop.trf.xlu0
        %v457 = vpop.trf.xlu0
        %458 = vxpose.xlu0.b32.start [1/16] %v171, 128
        %459 = vxpose.xlu0.b32.cont [2/16] %v187, 128
        %460 = vxpose.xlu0.b32.cont [3/16] %v203, 128
        %461 = vxpose.xlu0.b32.cont [4/16] %v219, 128
        %462 = vxpose.xlu0.b32.cont [5/16] %v235, 128
        %463 = vxpose.xlu0.b32.cont [6/16] %v251, 128
        %464 = vxpose.xlu0.b32.cont [7/16] %v267, 128
        %465 = vxpose.xlu0.b32.cont [8/16] %v283, 128
        %466 = vxpose.xlu0.b32.cont [9/16] %v299, 128
        %467 = vxpose.xlu0.b32.cont [10/16] %v315, 128
        %468 = vxpose.xlu0.b32.cont [11/16] %v331, 128
        %469 = vxpose.xlu0.b32.cont [12/16] %v347, 128
        %470 = vxpose.xlu0.b32.cont [13/16] %v363, 128
        %471 = vxpose.xlu0.b32.cont [14/16] %v379, 128
        %472 = vxpose.xlu0.b32.cont [15/16] %v395, 128
        %473 = vxpose.xlu0.b32.end [16/16] %v411, 128
        %v474 = vpop.trf.xlu0
        %v475 = vpop.trf.xlu0
        %v476 = vpop.trf.xlu0
        %v477 = vpop.trf.xlu0
        %v478 = vpop.trf.xlu0
        %v479 = vpop.trf.xlu0
        %v480 = vpop.trf.xlu0
        %v481 = vpop.trf.xlu0
        %v482 = vpop.trf.xlu0
        %v483 = vpop.trf.xlu0
        %v484 = vpop.trf.xlu0
        %v485 = vpop.trf.xlu0
        %v486 = vpop.trf.xlu0
        %v487 = vpop.trf.xlu0
        %v488 = vpop.trf.xlu0
        %v489 = vpop.trf.xlu0
        %490 = vxpose.xlu0.b32.start [1/16] %v172, 128
        %491 = vxpose.xlu0.b32.cont [2/16] %v188, 128
        %492 = vxpose.xlu0.b32.cont [3/16] %v204, 128
        %493 = vxpose.xlu0.b32.cont [4/16] %v220, 128
        %494 = vxpose.xlu0.b32.cont [5/16] %v236, 128
        %495 = vxpose.xlu0.b32.cont [6/16] %v252, 128
        %496 = vxpose.xlu0.b32.cont [7/16] %v268, 128
        %497 = vxpose.xlu0.b32.cont [8/16] %v284, 128
        %498 = vxpose.xlu0.b32.cont [9/16] %v300, 128
        %499 = vxpose.xlu0.b32.cont [10/16] %v316, 128
        %500 = vxpose.xlu0.b32.cont [11/16] %v332, 128
        %501 = vxpose.xlu0.b32.cont [12/16] %v348, 128
        %502 = vxpose.xlu0.b32.cont [13/16] %v364, 128
        %503 = vxpose.xlu0.b32.cont [14/16] %v380, 128
        %504 = vxpose.xlu0.b32.cont [15/16] %v396, 128
        %505 = vxpose.xlu0.b32.end [16/16] %v412, 128
        %v506 = vpop.trf.xlu0
        %v507 = vpop.trf.xlu0
        %v508 = vpop.trf.xlu0
        %v509 = vpop.trf.xlu0
        %v510 = vpop.trf.xlu0
        %v511 = vpop.trf.xlu0
        %v512 = vpop.trf.xlu0
        %v513 = vpop.trf.xlu0
        %v514 = vpop.trf.xlu0
        %v515 = vpop.trf.xlu0
        %v516 = vpop.trf.xlu0
        %v517 = vpop.trf.xlu0
        %v518 = vpop.trf.xlu0
        %v519 = vpop.trf.xlu0
        %v520 = vpop.trf.xlu0
        %v521 = vpop.trf.xlu0
        %522 = vxpose.xlu0.b32.start [1/16] %v173, 128
        %523 = vxpose.xlu0.b32.cont [2/16] %v189, 128
        %524 = vxpose.xlu0.b32.cont [3/16] %v205, 128
        %525 = vxpose.xlu0.b32.cont [4/16] %v221, 128
        %526 = vxpose.xlu0.b32.cont [5/16] %v237, 128
        %527 = vxpose.xlu0.b32.cont [6/16] %v253, 128
        %528 = vxpose.xlu0.b32.cont [7/16] %v269, 128
        %529 = vxpose.xlu0.b32.cont [8/16] %v285, 128
        %530 = vxpose.xlu0.b32.cont [9/16] %v301, 128
        %531 = vxpose.xlu0.b32.cont [10/16] %v317, 128
        %532 = vxpose.xlu0.b32.cont [11/16] %v333, 128
        %533 = vxpose.xlu0.b32.cont [12/16] %v349, 128
        %534 = vxpose.xlu0.b32.cont [13/16] %v365, 128
        %535 = vxpose.xlu0.b32.cont [14/16] %v381, 128
        %536 = vxpose.xlu0.b32.cont [15/16] %v397, 128
        %537 = vxpose.xlu0.b32.end [16/16] %v413, 128
        %v538 = vpop.trf.xlu0
        %v539 = vpop.trf.xlu0
        %v540 = vpop.trf.xlu0
        %v541 = vpop.trf.xlu0
        %v542 = vpop.trf.xlu0
        %v543 = vpop.trf.xlu0
        %v544 = vpop.trf.xlu0
        %v545 = vpop.trf.xlu0
        %v546 = vpop.trf.xlu0
        %v547 = vpop.trf.xlu0
        %v548 = vpop.trf.xlu0
        %v549 = vpop.trf.xlu0
        %v550 = vpop.trf.xlu0
        %v551 = vpop.trf.xlu0
        %v552 = vpop.trf.xlu0
        %v553 = vpop.trf.xlu0
        %554 = vxpose.xlu0.b32.start [1/16] %v174, 128
        %555 = vxpose.xlu0.b32.cont [2/16] %v190, 128
        %556 = vxpose.xlu0.b32.cont [3/16] %v206, 128
        %557 = vxpose.xlu0.b32.cont [4/16] %v222, 128
        %558 = vxpose.xlu0.b32.cont [5/16] %v238, 128
        %559 = vxpose.xlu0.b32.cont [6/16] %v254, 128
        %560 = vxpose.xlu0.b32.cont [7/16] %v270, 128
        %561 = vxpose.xlu0.b32.cont [8/16] %v286, 128
        %562 = vxpose.xlu0.b32.cont [9/16] %v302, 128
        %563 = vxpose.xlu0.b32.cont [10/16] %v318, 128
        %564 = vxpose.xlu0.b32.cont [11/16] %v334, 128
        %565 = vxpose.xlu0.b32.cont [12/16] %v350, 128
        %566 = vxpose.xlu0.b32.cont [13/16] %v366, 128
        %567 = vxpose.xlu0.b32.cont [14/16] %v382, 128
        %568 = vxpose.xlu0.b32.cont [15/16] %v398, 128
        %569 = vxpose.xlu0.b32.end [16/16] %v414, 128
        %v570 = vpop.trf.xlu0
        %v571 = vpop.trf.xlu0
        %v572 = vpop.trf.xlu0
        %v573 = vpop.trf.xlu0
        %v574 = vpop.trf.xlu0
        %v575 = vpop.trf.xlu0
        %v576 = vpop.trf.xlu0
        %v577 = vpop.trf.xlu0
        %v578 = vpop.trf.xlu0
        %v579 = vpop.trf.xlu0
        %v580 = vpop.trf.xlu0
        %v581 = vpop.trf.xlu0
        %v582 = vpop.trf.xlu0
        %v583 = vpop.trf.xlu0
        %v584 = vpop.trf.xlu0
        %v585 = vpop.trf.xlu0
        %586 = vxpose.xlu0.b32.start [1/16] %v175, 128
        %587 = vxpose.xlu0.b32.cont [2/16] %v191, 128
        %588 = vxpose.xlu0.b32.cont [3/16] %v207, 128
        %589 = vxpose.xlu0.b32.cont [4/16] %v223, 128
        %590 = vxpose.xlu0.b32.cont [5/16] %v239, 128
        %591 = vxpose.xlu0.b32.cont [6/16] %v255, 128
        %592 = vxpose.xlu0.b32.cont [7/16] %v271, 128
        %593 = vxpose.xlu0.b32.cont [8/16] %v287, 128
        %594 = vxpose.xlu0.b32.cont [9/16] %v303, 128
        %595 = vxpose.xlu0.b32.cont [10/16] %v319, 128
        %596 = vxpose.xlu0.b32.cont [11/16] %v335, 128
        %597 = vxpose.xlu0.b32.cont [12/16] %v351, 128
        %598 = vxpose.xlu0.b32.cont [13/16] %v367, 128
        %599 = vxpose.xlu0.b32.cont [14/16] %v383, 128
        %600 = vxpose.xlu0.b32.cont [15/16] %v399, 128
        %601 = vxpose.xlu0.b32.end [16/16] %v415, 128
        %v602 = vpop.trf.xlu0
        %v603 = vpop.trf.xlu0
        %v604 = vpop.trf.xlu0
        %v605 = vpop.trf.xlu0
        %v606 = vpop.trf.xlu0
        %v607 = vpop.trf.xlu0
        %v608 = vpop.trf.xlu0
        %v609 = vpop.trf.xlu0
        %v610 = vpop.trf.xlu0
        %v611 = vpop.trf.xlu0
        %v612 = vpop.trf.xlu0
        %v613 = vpop.trf.xlu0
        %v614 = vpop.trf.xlu0
        %v615 = vpop.trf.xlu0
        %v616 = vpop.trf.xlu0
        %v617 = vpop.trf.xlu0
        %618 = vxpose.xlu0.b32.start [1/16] %v176, 128
        %619 = vxpose.xlu0.b32.cont [2/16] %v192, 128
        %620 = vxpose.xlu0.b32.cont [3/16] %v208, 128
        %621 = vxpose.xlu0.b32.cont [4/16] %v224, 128
        %622 = vxpose.xlu0.b32.cont [5/16] %v240, 128
        %623 = vxpose.xlu0.b32.cont [6/16] %v256, 128
        %624 = vxpose.xlu0.b32.cont [7/16] %v272, 128
        %625 = vxpose.xlu0.b32.cont [8/16] %v288, 128
        %626 = vxpose.xlu0.b32.cont [9/16] %v304, 128
        %627 = vxpose.xlu0.b32.cont [10/16] %v320, 128
        %628 = vxpose.xlu0.b32.cont [11/16] %v336, 128
        %629 = vxpose.xlu0.b32.cont [12/16] %v352, 128
        %630 = vxpose.xlu0.b32.cont [13/16] %v368, 128
        %631 = vxpose.xlu0.b32.cont [14/16] %v384, 128
        %632 = vxpose.xlu0.b32.cont [15/16] %v400, 128
        %633 = vxpose.xlu0.b32.end [16/16] %v416, 128
        %v634 = vpop.trf.xlu0
        %v635 = vpop.trf.xlu0
        %v636 = vpop.trf.xlu0
        %v637 = vpop.trf.xlu0
        %v638 = vpop.trf.xlu0
        %v639 = vpop.trf.xlu0
        %v640 = vpop.trf.xlu0
        %v641 = vpop.trf.xlu0
        %v642 = vpop.trf.xlu0
        %v643 = vpop.trf.xlu0
        %v644 = vpop.trf.xlu0
        %v645 = vpop.trf.xlu0
        %v646 = vpop.trf.xlu0
        %v647 = vpop.trf.xlu0
        %v648 = vpop.trf.xlu0
        %v649 = vpop.trf.xlu0
        %650 = vxpose.xlu0.b32.start [1/16] %v177, 128
        %651 = vxpose.xlu0.b32.cont [2/16] %v193, 128
        %652 = vxpose.xlu0.b32.cont [3/16] %v209, 128
        %653 = vxpose.xlu0.b32.cont [4/16] %v225, 128
        %654 = vxpose.xlu0.b32.cont [5/16] %v241, 128
        %655 = vxpose.xlu0.b32.cont [6/16] %v257, 128
        %656 = vxpose.xlu0.b32.cont [7/16] %v273, 128
        %657 = vxpose.xlu0.b32.cont [8/16] %v289, 128
        %658 = vxpose.xlu0.b32.cont [9/16] %v305, 128
        %659 = vxpose.xlu0.b32.cont [10/16] %v321, 128
        %660 = vxpose.xlu0.b32.cont [11/16] %v337, 128
        %661 = vxpose.xlu0.b32.cont [12/16] %v353, 128
        %662 = vxpose.xlu0.b32.cont [13/16] %v369, 128
        %663 = vxpose.xlu0.b32.cont [14/16] %v385, 128
        %664 = vxpose.xlu0.b32.cont [15/16] %v401, 128
        %665 = vxpose.xlu0.b32.end [16/16] %v417, 128
        %v666 = vpop.trf.xlu0
        %v667 = vpop.trf.xlu0
        %v668 = vpop.trf.xlu0
        %v669 = vpop.trf.xlu0
        %v670 = vpop.trf.xlu0
        %v671 = vpop.trf.xlu0
        %v672 = vpop.trf.xlu0
        %v673 = vpop.trf.xlu0
        %v674 = vpop.trf.xlu0
        %v675 = vpop.trf.xlu0
        %v676 = vpop.trf.xlu0
        %v677 = vpop.trf.xlu0
        %v678 = vpop.trf.xlu0
        %v679 = vpop.trf.xlu0
        %v680 = vpop.trf.xlu0
        %v681 = vpop.trf.xlu0
        %682 = vxpose.xlu0.b32.start [1/16] %v178, 128
        %683 = vxpose.xlu0.b32.cont [2/16] %v194, 128
        %684 = vxpose.xlu0.b32.cont [3/16] %v210, 128
        %685 = vxpose.xlu0.b32.cont [4/16] %v226, 128
        %686 = vxpose.xlu0.b32.cont [5/16] %v242, 128
        %687 = vxpose.xlu0.b32.cont [6/16] %v258, 128
        %688 = vxpose.xlu0.b32.cont [7/16] %v274, 128
        %689 = vxpose.xlu0.b32.cont [8/16] %v290, 128
        %690 = vxpose.xlu0.b32.cont [9/16] %v306, 128
        %691 = vxpose.xlu0.b32.cont [10/16] %v322, 128
        %692 = vxpose.xlu0.b32.cont [11/16] %v338, 128
        %693 = vxpose.xlu0.b32.cont [12/16] %v354, 128
        %694 = vxpose.xlu0.b32.cont [13/16] %v370, 128
        %695 = vxpose.xlu0.b32.cont [14/16] %v386, 128
        %696 = vxpose.xlu0.b32.cont [15/16] %v402, 128
        %697 = vxpose.xlu0.b32.end [16/16] %v418, 128
        %v698 = vpop.trf.xlu0
        %v699 = vpop.trf.xlu0
        %v700 = vpop.trf.xlu0
        %v701 = vpop.trf.xlu0
        %v702 = vpop.trf.xlu0
        %v703 = vpop.trf.xlu0
        %v704 = vpop.trf.xlu0
        %v705 = vpop.trf.xlu0
        %v706 = vpop.trf.xlu0
        %v707 = vpop.trf.xlu0
        %v708 = vpop.trf.xlu0
        %v709 = vpop.trf.xlu0
        %v710 = vpop.trf.xlu0
        %v711 = vpop.trf.xlu0
        %v712 = vpop.trf.xlu0
        %v713 = vpop.trf.xlu0
        %714 = vxpose.xlu0.b32.start [1/16] %v179, 128
        %715 = vxpose.xlu0.b32.cont [2/16] %v195, 128
        %716 = vxpose.xlu0.b32.cont [3/16] %v211, 128
        %717 = vxpose.xlu0.b32.cont [4/16] %v227, 128
        %718 = vxpose.xlu0.b32.cont [5/16] %v243, 128
        %719 = vxpose.xlu0.b32.cont [6/16] %v259, 128
        %720 = vxpose.xlu0.b32.cont [7/16] %v275, 128
        %721 = vxpose.xlu0.b32.cont [8/16] %v291, 128
        %722 = vxpose.xlu0.b32.cont [9/16] %v307, 128
        %723 = vxpose.xlu0.b32.cont [10/16] %v323, 128
        %724 = vxpose.xlu0.b32.cont [11/16] %v339, 128
        %725 = vxpose.xlu0.b32.cont [12/16] %v355, 128
        %726 = vxpose.xlu0.b32.cont [13/16] %v371, 128
        %727 = vxpose.xlu0.b32.cont [14/16] %v387, 128
        %728 = vxpose.xlu0.b32.cont [15/16] %v403, 128
        %729 = vxpose.xlu0.b32.end [16/16] %v419, 128
        %v730 = vpop.trf.xlu0
        %v731 = vpop.trf.xlu0
        %v732 = vpop.trf.xlu0
        %v733 = vpop.trf.xlu0
        %v734 = vpop.trf.xlu0
        %v735 = vpop.trf.xlu0
        %v736 = vpop.trf.xlu0
        %v737 = vpop.trf.xlu0
        %v738 = vpop.trf.xlu0
        %v739 = vpop.trf.xlu0
        %v740 = vpop.trf.xlu0
        %v741 = vpop.trf.xlu0
        %v742 = vpop.trf.xlu0
        %v743 = vpop.trf.xlu0
        %v744 = vpop.trf.xlu0
        %v745 = vpop.trf.xlu0
        %746 = vxpose.xlu0.b32.start [1/16] %v180, 128
        %747 = vxpose.xlu0.b32.cont [2/16] %v196, 128
        %748 = vxpose.xlu0.b32.cont [3/16] %v212, 128
        %749 = vxpose.xlu0.b32.cont [4/16] %v228, 128
        %750 = vxpose.xlu0.b32.cont [5/16] %v244, 128
        %751 = vxpose.xlu0.b32.cont [6/16] %v260, 128
        %752 = vxpose.xlu0.b32.cont [7/16] %v276, 128
        %753 = vxpose.xlu0.b32.cont [8/16] %v292, 128
        %754 = vxpose.xlu0.b32.cont [9/16] %v308, 128
        %755 = vxpose.xlu0.b32.cont [10/16] %v324, 128
        %756 = vxpose.xlu0.b32.cont [11/16] %v340, 128
        %757 = vxpose.xlu0.b32.cont [12/16] %v356, 128
        %758 = vxpose.xlu0.b32.cont [13/16] %v372, 128
        %759 = vxpose.xlu0.b32.cont [14/16] %v388, 128
        %760 = vxpose.xlu0.b32.cont [15/16] %v404, 128
        %761 = vxpose.xlu0.b32.end [16/16] %v420, 128
        %v762 = vpop.trf.xlu0
        %v763 = vpop.trf.xlu0
        %v764 = vpop.trf.xlu0
        %v765 = vpop.trf.xlu0
        %v766 = vpop.trf.xlu0
        %v767 = vpop.trf.xlu0
        %v768 = vpop.trf.xlu0
        %v769 = vpop.trf.xlu0
        %v770 = vpop.trf.xlu0
        %v771 = vpop.trf.xlu0
        %v772 = vpop.trf.xlu0
        %v773 = vpop.trf.xlu0
        %v774 = vpop.trf.xlu0
        %v775 = vpop.trf.xlu0
        %v776 = vpop.trf.xlu0
        %v777 = vpop.trf.xlu0
        %778 = vxpose.xlu0.b32.start [1/16] %v181, 128
        %779 = vxpose.xlu0.b32.cont [2/16] %v197, 128
        %780 = vxpose.xlu0.b32.cont [3/16] %v213, 128
        %781 = vxpose.xlu0.b32.cont [4/16] %v229, 128
        %782 = vxpose.xlu0.b32.cont [5/16] %v245, 128
        %783 = vxpose.xlu0.b32.cont [6/16] %v261, 128
        %784 = vxpose.xlu0.b32.cont [7/16] %v277, 128
        %785 = vxpose.xlu0.b32.cont [8/16] %v293, 128
        %786 = vxpose.xlu0.b32.cont [9/16] %v309, 128
        %787 = vxpose.xlu0.b32.cont [10/16] %v325, 128
        %788 = vxpose.xlu0.b32.cont [11/16] %v341, 128
        %789 = vxpose.xlu0.b32.cont [12/16] %v357, 128
        %790 = vxpose.xlu0.b32.cont [13/16] %v373, 128
        %791 = vxpose.xlu0.b32.cont [14/16] %v389, 128
        %792 = vxpose.xlu0.b32.cont [15/16] %v405, 128
        %793 = vxpose.xlu0.b32.end [16/16] %v421, 128
        %v794 = vpop.trf.xlu0
        %v795 = vpop.trf.xlu0
        %v796 = vpop.trf.xlu0
        %v797 = vpop.trf.xlu0
        %v798 = vpop.trf.xlu0
        %v799 = vpop.trf.xlu0
        %v800 = vpop.trf.xlu0
        %v801 = vpop.trf.xlu0
        %v802 = vpop.trf.xlu0
        %v803 = vpop.trf.xlu0
        %v804 = vpop.trf.xlu0
        %v805 = vpop.trf.xlu0
        %v806 = vpop.trf.xlu0
        %v807 = vpop.trf.xlu0
        %v808 = vpop.trf.xlu0
        %v809 = vpop.trf.xlu0
        %810 = vxpose.xlu0.b32.start [1/16] %v182, 128
        %811 = vxpose.xlu0.b32.cont [2/16] %v198, 128
        %812 = vxpose.xlu0.b32.cont [3/16] %v214, 128
        %813 = vxpose.xlu0.b32.cont [4/16] %v230, 128
        %814 = vxpose.xlu0.b32.cont [5/16] %v246, 128
        %815 = vxpose.xlu0.b32.cont [6/16] %v262, 128
        %816 = vxpose.xlu0.b32.cont [7/16] %v278, 128
        %817 = vxpose.xlu0.b32.cont [8/16] %v294, 128
        %818 = vxpose.xlu0.b32.cont [9/16] %v310, 128
        %819 = vxpose.xlu0.b32.cont [10/16] %v326, 128
        %820 = vxpose.xlu0.b32.cont [11/16] %v342, 128
        %821 = vxpose.xlu0.b32.cont [12/16] %v358, 128
        %822 = vxpose.xlu0.b32.cont [13/16] %v374, 128
        %823 = vxpose.xlu0.b32.cont [14/16] %v390, 128
        %824 = vxpose.xlu0.b32.cont [15/16] %v406, 128
        %825 = vxpose.xlu0.b32.end [16/16] %v422, 128
        %v826 = vpop.trf.xlu0
        %v827 = vpop.trf.xlu0
        %v828 = vpop.trf.xlu0
        %v829 = vpop.trf.xlu0
        %v830 = vpop.trf.xlu0
        %v831 = vpop.trf.xlu0
        %v832 = vpop.trf.xlu0
        %v833 = vpop.trf.xlu0
        %v834 = vpop.trf.xlu0
        %v835 = vpop.trf.xlu0
        %v836 = vpop.trf.xlu0
        %v837 = vpop.trf.xlu0
        %v838 = vpop.trf.xlu0
        %v839 = vpop.trf.xlu0
        %v840 = vpop.trf.xlu0
        %v841 = vpop.trf.xlu0
        %842 = vxpose.xlu0.b32.start [1/16] %v183, 128
        %843 = vxpose.xlu0.b32.cont [2/16] %v199, 128
        %844 = vxpose.xlu0.b32.cont [3/16] %v215, 128
        %845 = vxpose.xlu0.b32.cont [4/16] %v231, 128
        %846 = vxpose.xlu0.b32.cont [5/16] %v247, 128
        %847 = vxpose.xlu0.b32.cont [6/16] %v263, 128
        %848 = vxpose.xlu0.b32.cont [7/16] %v279, 128
        %849 = vxpose.xlu0.b32.cont [8/16] %v295, 128
        %850 = vxpose.xlu0.b32.cont [9/16] %v311, 128
        %851 = vxpose.xlu0.b32.cont [10/16] %v327, 128
        %852 = vxpose.xlu0.b32.cont [11/16] %v343, 128
        %853 = vxpose.xlu0.b32.cont [12/16] %v359, 128
        %854 = vxpose.xlu0.b32.cont [13/16] %v375, 128
        %855 = vxpose.xlu0.b32.cont [14/16] %v391, 128
        %856 = vxpose.xlu0.b32.cont [15/16] %v407, 128
        %857 = vxpose.xlu0.b32.end [16/16] %v423, 128
        %v858 = vpop.trf.xlu0
        %v859 = vpop.trf.xlu0
        %v860 = vpop.trf.xlu0
        %v861 = vpop.trf.xlu0
        %v862 = vpop.trf.xlu0
        %v863 = vpop.trf.xlu0
        %v864 = vpop.trf.xlu0
        %v865 = vpop.trf.xlu0
        %v866 = vpop.trf.xlu0
        %v867 = vpop.trf.xlu0
        %v868 = vpop.trf.xlu0
        %v869 = vpop.trf.xlu0
        %v870 = vpop.trf.xlu0
        %v871 = vpop.trf.xlu0
        %v872 = vpop.trf.xlu0
        %v873 = vpop.trf.xlu0
        %874 = vxpose.xlu0.b32.start [1/16] %v184, 128
        %875 = vxpose.xlu0.b32.cont [2/16] %v200, 128
        %876 = vxpose.xlu0.b32.cont [3/16] %v216, 128
        %877 = vxpose.xlu0.b32.cont [4/16] %v232, 128
        %878 = vxpose.xlu0.b32.cont [5/16] %v248, 128
        %879 = vxpose.xlu0.b32.cont [6/16] %v264, 128
        %880 = vxpose.xlu0.b32.cont [7/16] %v280, 128
        %881 = vxpose.xlu0.b32.cont [8/16] %v296, 128
        %882 = vxpose.xlu0.b32.cont [9/16] %v312, 128
        %883 = vxpose.xlu0.b32.cont [10/16] %v328, 128
        %884 = vxpose.xlu0.b32.cont [11/16] %v344, 128
        %885 = vxpose.xlu0.b32.cont [12/16] %v360, 128
        %886 = vxpose.xlu0.b32.cont [13/16] %v376, 128
        %887 = vxpose.xlu0.b32.cont [14/16] %v392, 128
        %888 = vxpose.xlu0.b32.cont [15/16] %v408, 128
        %889 = vxpose.xlu0.b32.end [16/16] %v424, 128
        %v890 = vpop.trf.xlu0
        %v891 = vpop.trf.xlu0
        %v892 = vpop.trf.xlu0
        %v893 = vpop.trf.xlu0
        %v894 = vpop.trf.xlu0
        %v895 = vpop.trf.xlu0
        %v896 = vpop.trf.xlu0
        %v897 = vpop.trf.xlu0
        %v898 = vpop.trf.xlu0
        %v899 = vpop.trf.xlu0
        %v900 = vpop.trf.xlu0
        %v901 = vpop.trf.xlu0
        %v902 = vpop.trf.xlu0
        %v903 = vpop.trf.xlu0
        %v904 = vpop.trf.xlu0
        %v905 = vpop.trf.xlu0
        %906 = vxpose.xlu0.b32.start [1/16] %v185, 128
        %907 = vxpose.xlu0.b32.cont [2/16] %v201, 128
        %908 = vxpose.xlu0.b32.cont [3/16] %v217, 128
        %909 = vxpose.xlu0.b32.cont [4/16] %v233, 128
        %910 = vxpose.xlu0.b32.cont [5/16] %v249, 128
        %911 = vxpose.xlu0.b32.cont [6/16] %v265, 128
        %912 = vxpose.xlu0.b32.cont [7/16] %v281, 128
        %913 = vxpose.xlu0.b32.cont [8/16] %v297, 128
        %914 = vxpose.xlu0.b32.cont [9/16] %v313, 128
        %915 = vxpose.xlu0.b32.cont [10/16] %v329, 128
        %916 = vxpose.xlu0.b32.cont [11/16] %v345, 128
        %917 = vxpose.xlu0.b32.cont [12/16] %v361, 128
        %918 = vxpose.xlu0.b32.cont [13/16] %v377, 128
        %919 = vxpose.xlu0.b32.cont [14/16] %v393, 128
        %920 = vxpose.xlu0.b32.cont [15/16] %v409, 128
        %921 = vxpose.xlu0.b32.end [16/16] %v425, 128
        %v922 = vpop.trf.xlu0
        %v923 = vpop.trf.xlu0
        %v924 = vpop.trf.xlu0
        %v925 = vpop.trf.xlu0
        %v926 = vpop.trf.xlu0
        %v927 = vpop.trf.xlu0
        %v928 = vpop.trf.xlu0
        %v929 = vpop.trf.xlu0
        %v930 = vpop.trf.xlu0
        %v931 = vpop.trf.xlu0
        %v932 = vpop.trf.xlu0
        %v933 = vpop.trf.xlu0
        %v934 = vpop.trf.xlu0
        %v935 = vpop.trf.xlu0
        %v936 = vpop.trf.xlu0
        %v937 = vpop.trf.xlu0
        %938 = vst [vmem:[%s166] sm:$0xff] %v442
        %939 = vst [vmem:[%s166 + $0x8] sm:$0xff] %v443
        %940 = vst [vmem:[%s166 + $0x10] sm:$0xff] %v444
        %941 = vst [vmem:[%s166 + $0x18] sm:$0xff] %v445
        %942 = vst [vmem:[%s166 + $0x20] sm:$0xff] %v446
        %943 = vst [vmem:[%s166 + $0x28] sm:$0xff] %v447
        %944 = vst [vmem:[%s166 + $0x30] sm:$0xff] %v448
        %945 = vst [vmem:[%s166 + $0x38] sm:$0xff] %v449
        %946 = vst [vmem:[%s166 + $0x40] sm:$0xff] %v450
        %947 = vst [vmem:[%s166 + $0x48] sm:$0xff] %v451
        %948 = vst [vmem:[%s166 + $0x50] sm:$0xff] %v452
        %949 = vst [vmem:[%s166 + $0x58] sm:$0xff] %v453
        %950 = vst [vmem:[%s166 + $0x60] sm:$0xff] %v454
        %951 = vst [vmem:[%s166 + $0x68] sm:$0xff] %v455
        %952 = vst [vmem:[%s166 + $0x70] sm:$0xff] %v456
        %953 = vst [vmem:[%s166 + $0x78] sm:$0xff] %v457
        %954 = vst [vmem:[%s166 + $0x80] sm:$0xff] %v474
        %955 = vst [vmem:[%s166 + $0x88] sm:$0xff] %v475
        %956 = vst [vmem:[%s166 + $0x90] sm:$0xff] %v476
        %957 = vst [vmem:[%s166 + $0x98] sm:$0xff] %v477
        %958 = vst [vmem:[%s166 + $0xa0] sm:$0xff] %v478
        %959 = vst [vmem:[%s166 + $0xa8] sm:$0xff] %v479
        %960 = vst [vmem:[%s166 + $0xb0] sm:$0xff] %v480
        %961 = vst [vmem:[%s166 + $0xb8] sm:$0xff] %v481
        %962 = vst [vmem:[%s166 + $0xc0] sm:$0xff] %v482
        %963 = vst [vmem:[%s166 + $0xc8] sm:$0xff] %v483
        %964 = vst [vmem:[%s166 + $0xd0] sm:$0xff] %v484
        %965 = vst [vmem:[%s166 + $0xd8] sm:$0xff] %v485
        %966 = vst [vmem:[%s166 + $0xe0] sm:$0xff] %v486
        %967 = vst [vmem:[%s166 + $0xe8] sm:$0xff] %v487
        %968 = vst [vmem:[%s166 + $0xf0] sm:$0xff] %v488
        %969 = vst [vmem:[%s166 + $0xf8] sm:$0xff] %v489
        %970 = vst [vmem:[%s166 + $0x100] sm:$0xff] %v506
        %971 = vst [vmem:[%s166 + $0x108] sm:$0xff] %v507
        %972 = vst [vmem:[%s166 + $0x110] sm:$0xff] %v508
        %973 = vst [vmem:[%s166 + $0x118] sm:$0xff] %v509
        %974 = vst [vmem:[%s166 + $0x120] sm:$0xff] %v510
        %975 = vst [vmem:[%s166 + $0x128] sm:$0xff] %v511
        %976 = vst [vmem:[%s166 + $0x130] sm:$0xff] %v512
        %977 = vst [vmem:[%s166 + $0x138] sm:$0xff] %v513
        %978 = vst [vmem:[%s166 + $0x140] sm:$0xff] %v514
        %979 = vst [vmem:[%s166 + $0x148] sm:$0xff] %v515
        %980 = vst [vmem:[%s166 + $0x150] sm:$0xff] %v516
        %981 = vst [vmem:[%s166 + $0x158] sm:$0xff] %v517
        %982 = vst [vmem:[%s166 + $0x160] sm:$0xff] %v518
        %983 = vst [vmem:[%s166 + $0x168] sm:$0xff] %v519
        %984 = vst [vmem:[%s166 + $0x170] sm:$0xff] %v520
        %985 = vst [vmem:[%s166 + $0x178] sm:$0xff] %v521
        %986 = vst [vmem:[%s166 + $0x180] sm:$0xff] %v538
        %987 = vst [vmem:[%s166 + $0x188] sm:$0xff] %v539
        %988 = vst [vmem:[%s166 + $0x190] sm:$0xff] %v540
        %989 = vst [vmem:[%s166 + $0x198] sm:$0xff] %v541
        %990 = vst [vmem:[%s166 + $0x1a0] sm:$0xff] %v542
        %991 = vst [vmem:[%s166 + $0x1a8] sm:$0xff] %v543
        %992 = vst [vmem:[%s166 + $0x1b0] sm:$0xff] %v544
        %993 = vst [vmem:[%s166 + $0x1b8] sm:$0xff] %v545
        %994 = vst [vmem:[%s166 + $0x1c0] sm:$0xff] %v546
        %995 = vst [vmem:[%s166 + $0x1c8] sm:$0xff] %v547
        %996 = vst [vmem:[%s166 + $0x1d0] sm:$0xff] %v548
        %997 = vst [vmem:[%s166 + $0x1d8] sm:$0xff] %v549
        %998 = vst [vmem:[%s166 + $0x1e0] sm:$0xff] %v550
        %999 = vst [vmem:[%s166 + $0x1e8] sm:$0xff] %v551
        %1000 = vst [vmem:[%s166 + $0x1f0] sm:$0xff] %v552
        %1001 = vst [vmem:[%s166 + $0x1f8] sm:$0xff] %v553
        %1002 = vst [vmem:[%s166 + $0x200] sm:$0xff] %v570
        %1003 = vst [vmem:[%s166 + $0x208] sm:$0xff] %v571
        %1004 = vst [vmem:[%s166 + $0x210] sm:$0xff] %v572
        %1005 = vst [vmem:[%s166 + $0x218] sm:$0xff] %v573
        %1006 = vst [vmem:[%s166 + $0x220] sm:$0xff] %v574
        %1007 = vst [vmem:[%s166 + $0x228] sm:$0xff] %v575
        %1008 = vst [vmem:[%s166 + $0x230] sm:$0xff] %v576
        %1009 = vst [vmem:[%s166 + $0x238] sm:$0xff] %v577
        %1010 = vst [vmem:[%s166 + $0x240] sm:$0xff] %v578
        %1011 = vst [vmem:[%s166 + $0x248] sm:$0xff] %v579
        %1012 = vst [vmem:[%s166 + $0x250] sm:$0xff] %v580
        %1013 = vst [vmem:[%s166 + $0x258] sm:$0xff] %v581
        %1014 = vst [vmem:[%s166 + $0x260] sm:$0xff] %v582
        %1015 = vst [vmem:[%s166 + $0x268] sm:$0xff] %v583
        %1016 = vst [vmem:[%s166 + $0x270] sm:$0xff] %v584
        %1017 = vst [vmem:[%s166 + $0x278] sm:$0xff] %v585
        %1018 = vst [vmem:[%s166 + $0x280] sm:$0xff] %v602
        %1019 = vst [vmem:[%s166 + $0x288] sm:$0xff] %v603
        %1020 = vst [vmem:[%s166 + $0x290] sm:$0xff] %v604
        %1021 = vst [vmem:[%s166 + $0x298] sm:$0xff] %v605
        %1022 = vst [vmem:[%s166 + $0x2a0] sm:$0xff] %v606
        %1023 = vst [vmem:[%s166 + $0x2a8] sm:$0xff] %v607
        %1024 = vst [vmem:[%s166 + $0x2b0] sm:$0xff] %v608
        %1025 = vst [vmem:[%s166 + $0x2b8] sm:$0xff] %v609
        %1026 = vst [vmem:[%s166 + $0x2c0] sm:$0xff] %v610
        %1027 = vst [vmem:[%s166 + $0x2c8] sm:$0xff] %v611
        %1028 = vst [vmem:[%s166 + $0x2d0] sm:$0xff] %v612
        %1029 = vst [vmem:[%s166 + $0x2d8] sm:$0xff] %v613
        %1030 = vst [vmem:[%s166 + $0x2e0] sm:$0xff] %v614
        %1031 = vst [vmem:[%s166 + $0x2e8] sm:$0xff] %v615
        %1032 = vst [vmem:[%s166 + $0x2f0] sm:$0xff] %v616
        %1033 = vst [vmem:[%s166 + $0x2f8] sm:$0xff] %v617
        %1034 = vst [vmem:[%s166 + $0x300] sm:$0xff] %v634
        %1035 = vst [vmem:[%s166 + $0x308] sm:$0xff] %v635
        %1036 = vst [vmem:[%s166 + $0x310] sm:$0xff] %v636
        %1037 = vst [vmem:[%s166 + $0x318] sm:$0xff] %v637
        %1038 = vst [vmem:[%s166 + $0x320] sm:$0xff] %v638
        %1039 = vst [vmem:[%s166 + $0x328] sm:$0xff] %v639
        %1040 = vst [vmem:[%s166 + $0x330] sm:$0xff] %v640
        %1041 = vst [vmem:[%s166 + $0x338] sm:$0xff] %v641
        %1042 = vst [vmem:[%s166 + $0x340] sm:$0xff] %v642
        %1043 = vst [vmem:[%s166 + $0x348] sm:$0xff] %v643
        %1044 = vst [vmem:[%s166 + $0x350] sm:$0xff] %v644
        %1045 = vst [vmem:[%s166 + $0x358] sm:$0xff] %v645
        %1046 = vst [vmem:[%s166 + $0x360] sm:$0xff] %v646
        %1047 = vst [vmem:[%s166 + $0x368] sm:$0xff] %v647
        %1048 = vst [vmem:[%s166 + $0x370] sm:$0xff] %v648
        %1049 = vst [vmem:[%s166 + $0x378] sm:$0xff] %v649
        %1050 = vst [vmem:[%s166 + $0x380] sm:$0xff] %v666
        %1051 = vst [vmem:[%s166 + $0x388] sm:$0xff] %v667
        %1052 = vst [vmem:[%s166 + $0x390] sm:$0xff] %v668
        %1053 = vst [vmem:[%s166 + $0x398] sm:$0xff] %v669
        %1054 = vst [vmem:[%s166 + $0x3a0] sm:$0xff] %v670
        %1055 = vst [vmem:[%s166 + $0x3a8] sm:$0xff] %v671
        %1056 = vst [vmem:[%s166 + $0x3b0] sm:$0xff] %v672
        %1057 = vst [vmem:[%s166 + $0x3b8] sm:$0xff] %v673
        %1058 = vst [vmem:[%s166 + $0x3c0] sm:$0xff] %v674
        %1059 = vst [vmem:[%s166 + $0x3c8] sm:$0xff] %v675
        %1060 = vst [vmem:[%s166 + $0x3d0] sm:$0xff] %v676
        %1061 = vst [vmem:[%s166 + $0x3d8] sm:$0xff] %v677
        %1062 = vst [vmem:[%s166 + $0x3e0] sm:$0xff] %v678
        %1063 = vst [vmem:[%s166 + $0x3e8] sm:$0xff] %v679
        %1064 = vst [vmem:[%s166 + $0x3f0] sm:$0xff] %v680
        %1065 = vst [vmem:[%s166 + $0x3f8] sm:$0xff] %v681
        %1066 = vst [vmem:[%s166 + $0x400] sm:$0xff] %v698
        %1067 = vst [vmem:[%s166 + $0x408] sm:$0xff] %v699
        %1068 = vst [vmem:[%s166 + $0x410] sm:$0xff] %v700
        %1069 = vst [vmem:[%s166 + $0x418] sm:$0xff] %v701
        %1070 = vst [vmem:[%s166 + $0x420] sm:$0xff] %v702
        %1071 = vst [vmem:[%s166 + $0x428] sm:$0xff] %v703
        %1072 = vst [vmem:[%s166 + $0x430] sm:$0xff] %v704
        %1073 = vst [vmem:[%s166 + $0x438] sm:$0xff] %v705
        %1074 = vst [vmem:[%s166 + $0x440] sm:$0xff] %v706
        %1075 = vst [vmem:[%s166 + $0x448] sm:$0xff] %v707
        %1076 = vst [vmem:[%s166 + $0x450] sm:$0xff] %v708
        %1077 = vst [vmem:[%s166 + $0x458] sm:$0xff] %v709
        %1078 = vst [vmem:[%s166 + $0x460] sm:$0xff] %v710
        %1079 = vst [vmem:[%s166 + $0x468] sm:$0xff] %v711
        %1080 = vst [vmem:[%s166 + $0x470] sm:$0xff] %v712
        %1081 = vst [vmem:[%s166 + $0x478] sm:$0xff] %v713
        %1082 = vst [vmem:[%s166 + $0x480] sm:$0xff] %v730
        %1083 = vst [vmem:[%s166 + $0x488] sm:$0xff] %v731
        %1084 = vst [vmem:[%s166 + $0x490] sm:$0xff] %v732
        %1085 = vst [vmem:[%s166 + $0x498] sm:$0xff] %v733
        %1086 = vst [vmem:[%s166 + $0x4a0] sm:$0xff] %v734
        %1087 = vst [vmem:[%s166 + $0x4a8] sm:$0xff] %v735
        %1088 = vst [vmem:[%s166 + $0x4b0] sm:$0xff] %v736
        %1089 = vst [vmem:[%s166 + $0x4b8] sm:$0xff] %v737
        %1090 = vst [vmem:[%s166 + $0x4c0] sm:$0xff] %v738
        %1091 = vst [vmem:[%s166 + $0x4c8] sm:$0xff] %v739
        %1092 = vst [vmem:[%s166 + $0x4d0] sm:$0xff] %v740
        %1093 = vst [vmem:[%s166 + $0x4d8] sm:$0xff] %v741
        %1094 = vst [vmem:[%s166 + $0x4e0] sm:$0xff] %v742
        %1095 = vst [vmem:[%s166 + $0x4e8] sm:$0xff] %v743
        %1096 = vst [vmem:[%s166 + $0x4f0] sm:$0xff] %v744
        %1097 = vst [vmem:[%s166 + $0x4f8] sm:$0xff] %v745
        %1098 = vst [vmem:[%s166 + $0x500] sm:$0xff] %v762
        %1099 = vst [vmem:[%s166 + $0x508] sm:$0xff] %v763
        %1100 = vst [vmem:[%s166 + $0x510] sm:$0xff] %v764
        %1101 = vst [vmem:[%s166 + $0x518] sm:$0xff] %v765
        %1102 = vst [vmem:[%s166 + $0x520] sm:$0xff] %v766
        %1103 = vst [vmem:[%s166 + $0x528] sm:$0xff] %v767
        %1104 = vst [vmem:[%s166 + $0x530] sm:$0xff] %v768
        %1105 = vst [vmem:[%s166 + $0x538] sm:$0xff] %v769
        %1106 = vst [vmem:[%s166 + $0x540] sm:$0xff] %v770
        %1107 = vst [vmem:[%s166 + $0x548] sm:$0xff] %v771
        %1108 = vst [vmem:[%s166 + $0x550] sm:$0xff] %v772
        %1109 = vst [vmem:[%s166 + $0x558] sm:$0xff] %v773
        %1110 = vst [vmem:[%s166 + $0x560] sm:$0xff] %v774
        %1111 = vst [vmem:[%s166 + $0x568] sm:$0xff] %v775
        %1112 = vst [vmem:[%s166 + $0x570] sm:$0xff] %v776
        %1113 = vst [vmem:[%s166 + $0x578] sm:$0xff] %v777
        %1114 = vst [vmem:[%s166 + $0x580] sm:$0xff] %v794
        %1115 = vst [vmem:[%s166 + $0x588] sm:$0xff] %v795
        %1116 = vst [vmem:[%s166 + $0x590] sm:$0xff] %v796
        %1117 = vst [vmem:[%s166 + $0x598] sm:$0xff] %v797
        %1118 = vst [vmem:[%s166 + $0x5a0] sm:$0xff] %v798
        %1119 = vst [vmem:[%s166 + $0x5a8] sm:$0xff] %v799
        %1120 = vst [vmem:[%s166 + $0x5b0] sm:$0xff] %v800
        %1121 = vst [vmem:[%s166 + $0x5b8] sm:$0xff] %v801
        %1122 = vst [vmem:[%s166 + $0x5c0] sm:$0xff] %v802
        %1123 = vst [vmem:[%s166 + $0x5c8] sm:$0xff] %v803
        %1124 = vst [vmem:[%s166 + $0x5d0] sm:$0xff] %v804
        %1125 = vst [vmem:[%s166 + $0x5d8] sm:$0xff] %v805
        %1126 = vst [vmem:[%s166 + $0x5e0] sm:$0xff] %v806
        %1127 = vst [vmem:[%s166 + $0x5e8] sm:$0xff] %v807
        %1128 = vst [vmem:[%s166 + $0x5f0] sm:$0xff] %v808
        %1129 = vst [vmem:[%s166 + $0x5f8] sm:$0xff] %v809
        %1130 = vst [vmem:[%s166 + $0x600] sm:$0xff] %v826
        %1131 = vst [vmem:[%s166 + $0x608] sm:$0xff] %v827
        %1132 = vst [vmem:[%s166 + $0x610] sm:$0xff] %v828
        %1133 = vst [vmem:[%s166 + $0x618] sm:$0xff] %v829
        %1134 = vst [vmem:[%s166 + $0x620] sm:$0xff] %v830
        %1135 = vst [vmem:[%s166 + $0x628] sm:$0xff] %v831
        %1136 = vst [vmem:[%s166 + $0x630] sm:$0xff] %v832
        %1137 = vst [vmem:[%s166 + $0x638] sm:$0xff] %v833
        %1138 = vst [vmem:[%s166 + $0x640] sm:$0xff] %v834
        %1139 = vst [vmem:[%s166 + $0x648] sm:$0xff] %v835
        %1140 = vst [vmem:[%s166 + $0x650] sm:$0xff] %v836
        %1141 = vst [vmem:[%s166 + $0x658] sm:$0xff] %v837
        %1142 = vst [vmem:[%s166 + $0x660] sm:$0xff] %v838
        %1143 = vst [vmem:[%s166 + $0x668] sm:$0xff] %v839
        %1144 = vst [vmem:[%s166 + $0x670] sm:$0xff] %v840
        %1145 = vst [vmem:[%s166 + $0x678] sm:$0xff] %v841
        %1146 = vst [vmem:[%s166 + $0x680] sm:$0xff] %v858
        %1147 = vst [vmem:[%s166 + $0x688] sm:$0xff] %v859
        %1148 = vst [vmem:[%s166 + $0x690] sm:$0xff] %v860
        %1149 = vst [vmem:[%s166 + $0x698] sm:$0xff] %v861
        %1150 = vst [vmem:[%s166 + $0x6a0] sm:$0xff] %v862
        %1151 = vst [vmem:[%s166 + $0x6a8] sm:$0xff] %v863
        %1152 = vst [vmem:[%s166 + $0x6b0] sm:$0xff] %v864
        %1153 = vst [vmem:[%s166 + $0x6b8] sm:$0xff] %v865
        %1154 = vst [vmem:[%s166 + $0x6c0] sm:$0xff] %v866
        %1155 = vst [vmem:[%s166 + $0x6c8] sm:$0xff] %v867
        %1156 = vst [vmem:[%s166 + $0x6d0] sm:$0xff] %v868
        %1157 = vst [vmem:[%s166 + $0x6d8] sm:$0xff] %v869
        %1158 = vst [vmem:[%s166 + $0x6e0] sm:$0xff] %v870
        %1159 = vst [vmem:[%s166 + $0x6e8] sm:$0xff] %v871
        %1160 = vst [vmem:[%s166 + $0x6f0] sm:$0xff] %v872
        %1161 = vst [vmem:[%s166 + $0x6f8] sm:$0xff] %v873
        %1162 = vst [vmem:[%s166 + $0x700] sm:$0xff] %v890
        %1163 = vst [vmem:[%s166 + $0x708] sm:$0xff] %v891
        %1164 = vst [vmem:[%s166 + $0x710] sm:$0xff] %v892
        %1165 = vst [vmem:[%s166 + $0x718] sm:$0xff] %v893
        %1166 = vst [vmem:[%s166 + $0x720] sm:$0xff] %v894
        %1167 = vst [vmem:[%s166 + $0x728] sm:$0xff] %v895
        %1168 = vst [vmem:[%s166 + $0x730] sm:$0xff] %v896
        %1169 = vst [vmem:[%s166 + $0x738] sm:$0xff] %v897
        %1170 = vst [vmem:[%s166 + $0x740] sm:$0xff] %v898
        %1171 = vst [vmem:[%s166 + $0x748] sm:$0xff] %v899
        %1172 = vst [vmem:[%s166 + $0x750] sm:$0xff] %v900
        %1173 = vst [vmem:[%s166 + $0x758] sm:$0xff] %v901
        %1174 = vst [vmem:[%s166 + $0x760] sm:$0xff] %v902
        %1175 = vst [vmem:[%s166 + $0x768] sm:$0xff] %v903
        %1176 = vst [vmem:[%s166 + $0x770] sm:$0xff] %v904
        %1177 = vst [vmem:[%s166 + $0x778] sm:$0xff] %v905
        %1178 = vst [vmem:[%s166 + $0x780] sm:$0xff] %v922
        %1179 = vst [vmem:[%s166 + $0x788] sm:$0xff] %v923
        %1180 = vst [vmem:[%s166 + $0x790] sm:$0xff] %v924
        %1181 = vst [vmem:[%s166 + $0x798] sm:$0xff] %v925
        %1182 = vst [vmem:[%s166 + $0x7a0] sm:$0xff] %v926
        %1183 = vst [vmem:[%s166 + $0x7a8] sm:$0xff] %v927
        %1184 = vst [vmem:[%s166 + $0x7b0] sm:$0xff] %v928
        %1185 = vst [vmem:[%s166 + $0x7b8] sm:$0xff] %v929
        %1186 = vst [vmem:[%s166 + $0x7c0] sm:$0xff] %v930
        %1187 = vst [vmem:[%s166 + $0x7c8] sm:$0xff] %v931
        %1188 = vst [vmem:[%s166 + $0x7d0] sm:$0xff] %v932
        %1189 = vst [vmem:[%s166 + $0x7d8] sm:$0xff] %v933
        %1190 = vst [vmem:[%s166 + $0x7e0] sm:$0xff] %v934
        %1191 = vst [vmem:[%s166 + $0x7e8] sm:$0xff] %v935
        %1192 = vst [vmem:[%s166 + $0x7f0] sm:$0xff] %v936
        %1193 = vst [vmem:[%s166 + $0x7f8] sm:$0xff] %v937
        %s1194 = sand.u32 %s79, 1
        %s1195 = scalar_lea.sflag [#allocation4], %s1194
        %s1196 = sand.u32 %s79, 1
        %s1197 = smul.addr %s1196, 2048
        %s1198 = scalar_lea.vmem [#allocation5], %s1197
        // Predicated region
        $region29: #{tpu_custom_call.1} parent=23 // pred_check
          %p1199 = pneg %p89
        $region30: #{tpu_custom_call.1} parent=23 // pred_check_branch
          %1201 = sbr.rel (%p1199) target = $region32
        $region31: #{tpu_custom_call.1} parent=23 // pred_region
          %s1202 = smul.u32 256, %s25
          %s1204 = ssub.s32 32768, 32768
          %1205 = vsyncadd %s1195, %s1204
          %s1206 = sadd.s32 %s24, %s1202
          %s1207 = smul.addr %s23, 256
          %s1208 = sadd.s32 %s1206, %s1207
          %s1209 = smul.addr %s1208, 128
          %s1210 = scalar_lea.hbm %s1, %s1209
          %s1211 = sshll.u32 %s1198, 4
          %s1212 = int_to_ptr.vmem [resolvable:$true] %s1211
          %1217 = dma.vmem_to_hbm [thread:$0]  %s1212, 32768, %s1210, %s1195, 128, 128, 8
        $region32: #{tpu_custom_call.1} parent=23 // pred_fallthru
          _
      $region24: #{tpu_custom_call.1} parent=5 // pred_fallthru
        _
      %p1218 = scmp.le.s32.totalorder 2, %s13
      // Predicated region
      $region33: #{tpu_custom_call.1} parent=5 // pred_check
        %p1219 = pneg %p1218
      $region34: #{tpu_custom_call.1} parent=5 // pred_check_branch
        %1221 = sbr.rel (%p1219) target = $region36
      $region35: #{tpu_custom_call.1} parent=5 // pred_region
        %s1222 = ssub.s32 %s13, 2
        // Predicated region
        $region37: #{tpu_custom_call.1} parent=35 // pred_check
          %p1223 = pneg %p95
        $region38: #{tpu_custom_call.1} parent=35 // pred_check_branch
          %1225 = sbr.rel (%p1223) target = $region40
        $region39: #{tpu_custom_call.1} parent=35 // pred_region
          %s1226 = sand.u32 %s80, 1
          %s1227 = scalar_lea.sflag [#allocation4], %s1226
          %s1228 = sand.u32 %s80, 1
          %s1229 = smul.addr %s1228, 2048
          %s1230 = scalar_lea.vmem [#allocation5], %s1229
          %1231 = dma.done %s1227, 32768
        $region40: #{tpu_custom_call.1} parent=35 // pred_fallthru
          _
      $region36: #{tpu_custom_call.1} parent=5 // pred_fallthru
        _
    $region6: #{tpu_custom_call.1} parent=1 // loop_footer
      %s17 = sadd.s32 1, %s13
    $region7: #{tpu_custom_call.1} parent=1 // loop_footer_branch
      %12 = sbr.rel target = $region3
    $region8: #{tpu_custom_call.1} parent=1 // loop_exit
      _
    %1232 = vsyncpa [#allocation3], 1
    %s1233 = scalar_lea.sflag [#allocation3], 1
    %1234 = vsyncpa %s1233, 1
    %1235 = vsyncpa [#allocation4], 1
    %s1236 = scalar_lea.sflag [#allocation4], 1
    %1237 = vsyncpa %s1236, 1

</llo_original>
